<compile_context>
chip_gen: v7x
topology: tpu7x:2x2x1
jax: 0.10.0
libtpu: 0.0.40
codegen_flags: <defaults>
</compile_context>

<pallas_src>
import jax
import jax.numpy as jnp
from jax.experimental import pallas as pl
from jax.experimental.pallas import tpu as pltpu


# ----------------------------- kernel ---------------------------------------


def _mlp_kernel(x_ref, wg_ref, wu_ref, wd_ref, o_ref, acc_ref=None):
    """Grid = (M_tiles, FF_tiles). FF is the reduction axis ("arbitrary"); the
    output tile is resident across it. If acc_ref is None the output itself is
    the f32 accumulator (output dtype is f32)."""
    acc = o_ref if acc_ref is None else acc_ref
    k = pl.program_id(1)

    @pl.when(k == 0)
    def _():
        acc[...] = jnp.zeros_like(acc)

    x = x_ref[...]                                             # (tm, D)
    # Gate / up projections on the MXU, f32 accumulation.
    gate = jnp.dot(x, wg_ref[...], preferred_element_type=jnp.float32)
    up = jnp.dot(x, wu_ref[...], preferred_element_type=jnp.float32)
    # gated-silu in f32 (sigmoid goes to the EUP slot).
    h = (gate * jax.nn.sigmoid(gate)) * up                     # (tm, tf)
    # Down projection on the MXU in the weight dtype (bf16 if weights are bf16).
    acc[...] += jnp.dot(h.astype(wd_ref.dtype), wd_ref[...],
                        preferred_element_type=jnp.float32)    # (tm, D)

    if acc_ref is not None:
        @pl.when(k == pl.num_programs(1) - 1)
        def _():
            o_ref[...] = acc_ref[...].astype(o_ref.dtype)


# ----------------------------- tiling helpers --------------------------------


def _round_up(a, b):
    return (a + b - 1) // b * b


def _pick_ff_tile(ff, target):
    """Largest tile <= target that divides ff and is a multiple of 128, or ff
    itself when ff <= target / no such divisor exists."""
    if ff <= target:
        return ff
    t = (target // 128) * 128
    while t >= 128:
        if ff % t == 0:
            return t
        t -= 128
    return ff


def _shrink_ff_tile(ff, tf):
    """Next smaller valid FF tile (multiple of 128 dividing ff), or None."""
    t = ((tf - 1) // 128) * 128
    while t >= 128:
        if ff % t == 0:
            return t
        t -= 128
    return None


def _tpu_vmem_bytes():
    """Per-core VMEM capacity; conservative 64 MiB fallback (v7x per-TC)."""
    try:
        info = pltpu.get_tpu_info()
        cap = int(getattr(info, "vmem_capacity_bytes", 0))
        if cap > 0:
            return cap
    except Exception:
        pass
    return 64 * 1024 * 1024


# ----------------------------- wrapper ---------------------------------------


def mlp_forward(x, w_gate, w_up, w_down, *, tm=None, tf=None,
                vmem_budget_bytes=None):
    """x: (B, L, D); w_gate/w_up: (D, FF); w_down: (FF, D).

    Defaults: tm=512 (weights are re-streamed from HBM per m-tile, so a large
    tm is the main lever against the weight-DMA roofline), tf=512/1024
    depending on the VMEM budget; both auto-shrink to the generation-aware
    VMEM budget (v7x: 64 MiB/TC, v5e/v6e: 128 MiB). bf16 inputs/weights are
    strongly preferred on v5e (f32 roughly halves both MXU and HBM throughput).
    """
    B, L, D = x.shape
    Dw, FF = w_gate.shape
    assert Dw == D and w_up.shape == (D, FF) and w_down.shape == (FF, D)
    M = B * L

    in_bytes = jnp.dtype(x.dtype).itemsize
    w_bytes = jnp.dtype(w_gate.dtype).itemsize
    out_dtype = x.dtype
    out_bytes = in_bytes
    acc_in_out = jnp.dtype(out_dtype) == jnp.dtype(jnp.float32)

    vmem_cap = _tpu_vmem_bytes()
    two_core_likely = vmem_cap <= 80 * 1024 * 1024   # v7x: 64 MiB/TC, 2 TCs
    if vmem_budget_bytes is None:
        vmem_budget_bytes = int(vmem_cap * 0.80)

    # Dtype-native sublane multiple for the M (second-to-last) dimension.
    sub = {1: 32, 2: 16}.get(in_bytes, 8)

    if tm is None:
        tm = 512
    if tf is None:
        tf = 1024 if vmem_budget_bytes >= 80 * 1024 * 1024 else 512

    # ---- tile selection ----
    tm = max(sub, min(_round_up(tm, sub), _round_up(M, sub)))
    tf = _pick_ff_tile(FF, tf)             # guarantees FF % tf == 0

    def vmem_est(tm_, tf_):
        est = 2 * tm_ * D * in_bytes              # x tile, double-buffered
        est += 2 * D * tf_ * w_bytes              # gate weight tile
        est += 2 * D * tf_ * w_bytes              # up weight tile
        est += 2 * tf_ * D * w_bytes              # down-proj weight tile
        est += 2 * tm_ * D * out_bytes            # output tile
        if not acc_in_out:
            est += tm_ * D * 4                    # f32 accumulator scratch
        # Compiler-materialized intermediates: gate/up/h in f32 + bf16 cast of h.
        est += 3 * tm_ * tf_ * 4 + tm_ * tf_ * w_bytes
        return est

    # Shrink tf first (tf only affects step count, not arithmetic intensity),
    # then tm.
    while vmem_est(tm, tf) > vmem_budget_bytes:
        nt = _shrink_ff_tile(FF, tf)
        if nt is not None:
            tf = nt
        elif tm > sub:
            tm = _round_up(max(sub, tm // 2), sub)
        else:
            break

    # Avoid the full jnp.pad copy of x when a divisor of M in [tm//2, tm] exists.
    if M % tm != 0:
        t = (tm // sub) * sub
        floor = max(sub, tm // 2)
        while t >= floor:
            if M % t == 0:
                tm = t
                break
            t -= sub

    # v7x: a single m-tile would leave one TensorCore idle on the "parallel"
    # M axis -> split the tile in two.
    if two_core_likely and (M + tm - 1) // tm == 1 and tm > sub:
        tm = _round_up(max(sub, (M + 1) // 2), sub)

    mp = _round_up(M, tm)
    m_tiles = mp // tm
    ff_tiles = FF // tf

    # ---- host-side prep (no weight copies; only pad x if unavoidable) ----
    x2 = x.reshape(M, D)
    if mp != M:
        x2 = jnp.pad(x2, ((0, mp - M), (0, 0)))   # zero rows are benign

    cost = pl.CostEstimate(
        flops=6 * mp * D * FF,                        # 3 matmuls
        transcendentals=mp * FF,                      # sigmoid
        bytes_accessed=(mp * D * in_bytes             # x read
                        + m_tiles * 3 * D * FF * w_bytes   # weights per m-tile
                        + mp * D * out_bytes),        # output write
    )

    # Clamp to physical VMEM (critical on v7x's 64 MiB/TC).
    vmem_limit = int(min(vmem_cap,
                         max(int(1.3 * vmem_est(tm, tf)), 32 << 20)))
    scratch = [] if acc_in_out else [pltpu.VMEM((tm, D), jnp.float32)]

    out2 = pl.pallas_call(
        _mlp_kernel,
        out_shape=jax.ShapeDtypeStruct((mp, D), out_dtype),
        grid_spec=pltpu.PrefetchScalarGridSpec(
            num_scalar_prefetch=0,
            grid=(m_tiles, ff_tiles),
            in_specs=[
                pl.BlockSpec((tm, D), lambda i, k: (i, 0)),   # x rows
                pl.BlockSpec((D, tf), lambda i, k: (0, k)),   # W_gate cols
                pl.BlockSpec((D, tf), lambda i, k: (0, k)),   # W_up cols
                pl.BlockSpec((tf, D), lambda i, k: (k, 0)),   # W_down rows
            ],
            out_specs=pl.BlockSpec((tm, D), lambda i, k: (i, 0)),
            scratch_shapes=scratch,
        ),
        compiler_params=pltpu.CompilerParams(
            dimension_semantics=("parallel", "arbitrary"),
            vmem_limit_bytes=vmem_limit,
        ),
        cost_estimate=cost,
    )(x2, w_gate, w_up, w_down)

    if mp != M:
        out2 = out2[:M]
    return out2.reshape(B, L, D)


# ----------------------------- reference & test -------------------------------


def _ref_mlp(x, w_gate, w_up, w_down):
    gate = jnp.einsum("bld,df->blf", x, w_gate)
    up = jnp.einsum("bld,df->blf", x, w_up)
    return jnp.einsum("blf,fd->bld", jax.nn.silu(gate) * up, w_down)


if __name__ == "__main__":
    # Small deterministic shapes: (batch, seq, hidden) with FF = 2*hidden.
    B, L, D, FF = 2, 8, 32, 64

    key = jax.random.PRNGKey(0)
    kx, kg, ku, kd = jax.random.split(key, 4)
    x = jax.random.normal(kx, (B, L, D), dtype=jnp.float32)
    # skip_init in torch leaves weights uninitialized; we just need fixed values.
    w_gate = jax.random.normal(kg, (D, FF), dtype=jnp.float32) * 0.05
    w_up = jax.random.normal(ku, (D, FF), dtype=jnp.float32) * 0.05
    w_down = jax.random.normal(kd, (FF, D), dtype=jnp.float32) * 0.05

    # f32 path (accumulates directly into the output block, no scratch).
    out = jax.block_until_ready(mlp_forward(x, w_gate, w_up, w_down))
    ref = _ref_mlp(x, w_gate, w_up, w_down)
    assert out.shape == (B, L, D)
    assert jnp.allclose(out, ref, atol=1e-4, rtol=1e-4), "f32 mismatch vs reference"

    # bf16 path (preferred MXU/HBM dtype, esp. on v5e) with f32 scratch accumulator.
    xb = x.astype(jnp.bfloat16)
    out_bf16 = jax.block_until_ready(
        mlp_forward(xb, w_gate.astype(jnp.bfloat16), w_up.astype(jnp.bfloat16),
                    w_down.astype(jnp.bfloat16)))
    assert out_bf16.dtype == jnp.bfloat16
    assert jnp.allclose(out_bf16.astype(jnp.float32), ref, atol=5e-2, rtol=5e-2), \
        "bf16 mismatch vs reference"

    print("KERNEL_OK")
</pallas_src>

<mosaic_0001>
module attributes {stable_mosaic.version = 11 : i64} {
  func.func @_mlp_kernel(%arg0: i32, %arg1: i32, %arg2: memref<8x32xf32, #tpu.memory_space<vmem>>, %arg3: memref<32x64xf32, #tpu.memory_space<vmem>>, %arg4: memref<32x64xf32, #tpu.memory_space<vmem>>, %arg5: memref<64x32xf32, #tpu.memory_space<vmem>>, %arg6: memref<8x32xf32, #tpu.memory_space<vmem>>) attributes {dimension_semantics = [#tpu.dimension_semantics<parallel>, #tpu.dimension_semantics<arbitrary>], iteration_bounds = array<i64: 2, 1>, scalar_prefetch = 0 : i64, scratch_operands = 0 : i64, tpu.core_type = #tpu.core_type<tc>, window_params = [{transform_indices = @transform_0, window_bounds = array<i64: 8, 32>}, {transform_indices = @transform_1, window_bounds = array<i64: 32, 64>}, {transform_indices = @transform_2, window_bounds = array<i64: 32, 64>}, {transform_indices = @transform_3, window_bounds = array<i64: 64, 32>}, {transform_indices = @transform_4, window_bounds = array<i64: 8, 32>}]} {
    %c0_i32 = arith.constant 0 : i32
    %0 = arith.cmpi eq, %arg1, %c0_i32 : i32
    %1 = arith.extui %0 : i1 to i32
    %c0_i32_0 = arith.constant 0 : i32
    %2 = arith.cmpi ne, %1, %c0_i32_0 : i32
    scf.if %2 {
      %cst_15 = arith.constant 0.000000e+00 : f32
      %20 = vector.broadcast %cst_15 : f32 to vector<8x32xf32>
      %c0_16 = arith.constant 0 : index
      %c0_17 = arith.constant 0 : index
      %21 = vector.load %arg6[%c0_16, %c0_17] : memref<8x32xf32, #tpu.memory_space<vmem>>, vector<8x32xf32>
      tpu.vector_store %arg6[%c0_16, %c0_17], %20 {strides = array<i32>} : memref<8x32xf32, #tpu.memory_space<vmem>>, vector<8x32xf32>,
    } else {
    }
    %c0 = arith.constant 0 : index
    %c0_1 = arith.constant 0 : index
    %3 = vector.load %arg2[%c0, %c0_1] : memref<8x32xf32, #tpu.memory_space<vmem>>, vector<8x32xf32>
    %c0_2 = arith.constant 0 : index
    %c0_3 = arith.constant 0 : index
    %4 = vector.load %arg3[%c0_2, %c0_3] : memref<32x64xf32, #tpu.memory_space<vmem>>, vector<32x64xf32>
    %cst = arith.constant dense<0.000000e+00> : vector<8x64xf32>
    %5 = tpu.matmul %3, %4, %cst {dimension_numbers = #tpu.dot_dimension_numbers<[1], [0], [0], [1], [0, 0, 1, 1], [], []>} : vector<8x32xf32>, vector<32x64xf32>, vector<8x64xf32> -> vector<8x64xf32>
    %c0_4 = arith.constant 0 : index
    %c0_5 = arith.constant 0 : index
    %6 = vector.load %arg4[%c0_4, %c0_5] : memref<32x64xf32, #tpu.memory_space<vmem>>, vector<32x64xf32>
    %cst_6 = arith.constant dense<0.000000e+00> : vector<8x64xf32>
    %7 = tpu.matmul %3, %6, %cst_6 {dimension_numbers = #tpu.dot_dimension_numbers<[1], [0], [0], [1], [0, 0, 1, 1], [], []>} : vector<8x32xf32>, vector<32x64xf32>, vector<8x64xf32> -> vector<8x64xf32>
    %8 = arith.negf %5 : vector<8x64xf32>
    %9 = math.exp %8 : vector<8x64xf32>
    %cst_7 = arith.constant 1.000000e+00 : f32
    %10 = vector.broadcast %cst_7 : f32 to vector<8x64xf32>
    %11 = arith.addf %10, %9 : vector<8x64xf32>
    %12 = arith.divf %10, %11 : vector<8x64xf32>
    %13 = arith.mulf %5, %12 : vector<8x64xf32>
    %14 = arith.mulf %13, %7 : vector<8x64xf32>
    %c0_8 = arith.constant 0 : index
    %c0_9 = arith.constant 0 : index
    %15 = vector.load %arg6[%c0_8, %c0_9] : memref<8x32xf32, #tpu.memory_space<vmem>>, vector<8x32xf32>
    %c0_10 = arith.constant 0 : index
    %c0_11 = arith.constant 0 : index
    %16 = vector.load %arg5[%c0_10, %c0_11] : memref<64x32xf32, #tpu.memory_space<vmem>>, vector<64x32xf32>
    %cst_12 = arith.constant dense<0.000000e+00> : vector<8x32xf32>
    %17 = tpu.matmul %14, %16, %cst_12 {dimension_numbers = #tpu.dot_dimension_numbers<[1], [0], [0], [1], [0, 0, 1, 1], [], []>} : vector<8x64xf32>, vector<64x32xf32>, vector<8x32xf32> -> vector<8x32xf32>
    %18 = arith.addf %15, %17 : vector<8x32xf32>
    %c0_13 = arith.constant 0 : index
    %c0_14 = arith.constant 0 : index
    %19 = vector.load %arg6[%c0_13, %c0_14] : memref<8x32xf32, #tpu.memory_space<vmem>>, vector<8x32xf32>
    tpu.vector_store %arg6[%c0_13, %c0_14], %18 {strides = array<i32>} : memref<8x32xf32, #tpu.memory_space<vmem>>, vector<8x32xf32>,
    return
  }
  func.func @transform_0(%arg0: i32, %arg1: i32) -> (i32, i32) {
    %c0_i32 = arith.constant 0 : i32
    %c0_i32_0 = arith.constant 0 : i32
    return %arg0, %c0_i32 : i32, i32
  }
  func.func @transform_1(%arg0: i32, %arg1: i32) -> (i32, i32) {
    %c0_i32 = arith.constant 0 : i32
    %c0_i32_0 = arith.constant 0 : i32
    return %c0_i32, %arg1 : i32, i32
  }
  func.func @transform_2(%arg0: i32, %arg1: i32) -> (i32, i32) {
    %c0_i32 = arith.constant 0 : i32
    %c0_i32_0 = arith.constant 0 : i32
    return %c0_i32, %arg1 : i32, i32
  }
  func.func @transform_3(%arg0: i32, %arg1: i32) -> (i32, i32) {
    %c0_i32 = arith.constant 0 : i32
    %c0_i32_0 = arith.constant 0 : i32
    return %arg1, %c0_i32 : i32, i32
  }
  func.func @transform_4(%arg0: i32, %arg1: i32) -> (i32, i32) {
    %c0_i32 = arith.constant 0 : i32
    %c0_i32_0 = arith.constant 0 : i32
    return %arg0, %c0_i32 : i32, i32
  }
}

</mosaic_0001>

<llo_original>
// kernel: tpu_custom_call.1
$region0: #{tpu_custom_call.1}
  #allocation0 [shape = 'u32[]', space=smem, size = 0x4, offset = 0x4, fixed_abs, tag = 'smem constant byte address 0x4 - core index']
  #allocation1 [shape = 'u32[144,128]{1,0:T(1,128)}', space=vmem, size = 0x12000, scoped, tag = 'internal scratch']
  %s0 = inlined_call_operand.vmem [shape: f32[16,32], index: 0, kind: input, shape index: {}]
  %s1 = inlined_call_operand.vmem [shape: f32[32,64], index: 1, kind: input, shape index: {}]
  %s2 = inlined_call_operand.vmem [shape: f32[32,64], index: 2, kind: input, shape index: {}]
  %s3 = inlined_call_operand.vmem [shape: f32[64,32], index: 3, kind: input, shape index: {}]
  %s4 = inlined_call_operand.hbm [shape: f32[16,32], index: 4, kind: output, shape index: {}]
  %s5 = sld [smem:[#allocation0]]
  $region53: #{tpu_custom_call.1} parent=0
    _
  %s7 = ssub.s32 1, %s5
  %s8 = scalar_select 0, %s7, %s5
  $region1: #{tpu_custom_call.1} parent=0
    #allocation2 [shape = 'u8[8192]{0}', space=vmem, size = 0x2000, scoped, tag = 'output window, operand 0']
    #allocation3 [shape = 's32[2]{0}', space=sflag, size = 0x8, scoped, tag = 'scoped memory for tpu_custom_call.1']
    %9 = vsyncpa [#allocation3], 0
    %s10 = scalar_lea.sflag [#allocation3], 1
    %11 = vsyncpa %s10, 0
    loop: start=0, step=1, limit=4
    $region2: #{tpu_custom_call.1} parent=1 // loop_pre_header
      _
    $region3: #{tpu_custom_call.1} parent=1 // loop_header
      %s13 = sphi 0, %s17
      %p14 = scmp.ge.s32.totalorder %s13, 4
      %s20 = sphi 0, %s32
      %s21 = sphi 0, %s28
      %s22 = sphi 0, %s20
      %s23 = sphi 0, %s21
      %s24 = sphi 0, %s22
      %s25 = sphi 0, %s23
      %s35 = sphi 0, %s37
      %s38 = sphi 0, %s35
      %s39 = sphi 0, %s38
      %s55 = sphi 0, %s39
      %s61 = sphi 0, %s63
      %s64 = sphi 0, %s61
      %s65 = sphi 0, %s64
      %s81 = sphi 0, %s65
      %s87 = sphi 0, %s89
      %s90 = sphi 0, %s87
      %s91 = sphi 0, %s90
      %s107 = sphi 0, %s91
      %s113 = sphi 0, %s115
      %s116 = sphi 0, %s113
      %s117 = sphi 0, %s116
      %s133 = sphi 0, %s117
      %s139 = sphi 0, %s141
      %s142 = sphi 0, %s139
      %s143 = sphi 0, %s142
      %s159 = sphi 0, %s143
    $region4: #{tpu_custom_call.1} parent=1 // loop_header_branch
      %16 = sbr.rel (%p14) target = $region8
    $region5: #{tpu_custom_call.1} parent=1 // loop_body
      %s18 = ssub.s32 %s13, 1
      %s19 = ssub.s32 %s13, 2
      %s26 = sadd.s32 1, %s21
      %p27 = scmp.ge.s32.totalorder %s26, 1
      %s28 = scalar_select %p27, 0, %s26
      %s29 = sadd.s32 1, %s20
      %s30 = scalar_select %p27, %s29, %s20
      %p31 = scmp.ge.s32.totalorder %s30, 2
      %s32 = scalar_select %p31, 0, %s30
      %s33 = ssub.s32 %s20, %s32
      %p34 = scmp.eq.s32.totalorder %s33, 0
      %s36 = sadd.s32 %s35, 1
      %s37 = scalar_select %p34, %s35, %s36
      %p40 = pneg %p34
      %p41 = scmp.eq.s32.totalorder %s13, 1
      %p42 = por %p40, %p41
      %p43 = scmp.ne.s32.totalorder %s35, %s38
      %p44 = scmp.eq.s32.totalorder %s13, 0
      %p45 = por %p43, %p44
      %p46 = scmp.ne.s32.totalorder %s35, %s38
      %p47 = scmp.eq.s32.totalorder %s18, 1
      %p48 = por %p46, %p47
      %p49 = scmp.ne.s32.totalorder %s38, %s39
      %p50 = scmp.eq.s32.totalorder %s18, 0
      %p51 = por %p49, %p50
      %p52 = scmp.ne.s32.totalorder %s38, %s39
      %p53 = scmp.eq.s32.totalorder %s19, 1
      %p54 = por %p52, %p53
      %p56 = scmp.ne.s32.totalorder %s39, %s55
      %p57 = scmp.eq.s32.totalorder %s19, 0
      %p58 = por %p56, %p57
      %s59 = ssub.s32 %s21, %s28
      %p60 = scmp.eq.s32.totalorder %s59, 0
      %s62 = sadd.s32 %s61, 1
      %s63 = scalar_select %p60, %s61, %s62
      %p66 = pneg %p60
      %p67 = scmp.eq.s32.totalorder %s13, 1
      %p68 = por %p66, %p67
      %p69 = scmp.ne.s32.totalorder %s61, %s64
      %p70 = scmp.eq.s32.totalorder %s13, 0
      %p71 = por %p69, %p70
      %p72 = scmp.ne.s32.totalorder %s61, %s64
      %p73 = scmp.eq.s32.totalorder %s18, 1
      %p74 = por %p72, %p73
      %p75 = scmp.ne.s32.totalorder %s64, %s65
      %p76 = scmp.eq.s32.totalorder %s18, 0
      %p77 = por %p75, %p76
      %p78 = scmp.ne.s32.totalorder %s64, %s65
      %p79 = scmp.eq.s32.totalorder %s19, 1
      %p80 = por %p78, %p79
      %p82 = scmp.ne.s32.totalorder %s65, %s81
      %p83 = scmp.eq.s32.totalorder %s19, 0
      %p84 = por %p82, %p83
      %s85 = ssub.s32 %s21, %s28
      %p86 = scmp.eq.s32.totalorder %s85, 0
      %s88 = sadd.s32 %s87, 1
      %s89 = scalar_select %p86, %s87, %s88
      %p92 = pneg %p86
      %p93 = scmp.eq.s32.totalorder %s13, 1
      %p94 = por %p92, %p93
      %p95 = scmp.ne.s32.totalorder %s87, %s90
      %p96 = scmp.eq.s32.totalorder %s13, 0
      %p97 = por %p95, %p96
      %p98 = scmp.ne.s32.totalorder %s87, %s90
      %p99 = scmp.eq.s32.totalorder %s18, 1
      %p100 = por %p98, %p99
      %p101 = scmp.ne.s32.totalorder %s90, %s91
      %p102 = scmp.eq.s32.totalorder %s18, 0
      %p103 = por %p101, %p102
      %p104 = scmp.ne.s32.totalorder %s90, %s91
      %p105 = scmp.eq.s32.totalorder %s19, 1
      %p106 = por %p104, %p105
      %p108 = scmp.ne.s32.totalorder %s91, %s107
      %p109 = scmp.eq.s32.totalorder %s19, 0
      %p110 = por %p108, %p109
      %s111 = ssub.s32 %s21, %s28
      %p112 = scmp.eq.s32.totalorder %s111, 0
      %s114 = sadd.s32 %s113, 1
      %s115 = scalar_select %p112, %s113, %s114
      %p118 = pneg %p112
      %p119 = scmp.eq.s32.totalorder %s13, 1
      %p120 = por %p118, %p119
      %p121 = scmp.ne.s32.totalorder %s113, %s116
      %p122 = scmp.eq.s32.totalorder %s13, 0
      %p123 = por %p121, %p122
      %p124 = scmp.ne.s32.totalorder %s113, %s116
      %p125 = scmp.eq.s32.totalorder %s18, 1
      %p126 = por %p124, %p125
      %p127 = scmp.ne.s32.totalorder %s116, %s117
      %p128 = scmp.eq.s32.totalorder %s18, 0
      %p129 = por %p127, %p128
      %p130 = scmp.ne.s32.totalorder %s116, %s117
      %p131 = scmp.eq.s32.totalorder %s19, 1
      %p132 = por %p130, %p131
      %p134 = scmp.ne.s32.totalorder %s117, %s133
      %p135 = scmp.eq.s32.totalorder %s19, 0
      %p136 = por %p134, %p135
      %s137 = ssub.s32 %s20, %s32
      %p138 = scmp.eq.s32.totalorder %s137, 0
      %s140 = sadd.s32 %s139, 1
      %s141 = scalar_select %p138, %s139, %s140
      %p144 = pneg %p138
      %p145 = scmp.eq.s32.totalorder %s13, 1
      %p146 = por %p144, %p145
      %p147 = scmp.ne.s32.totalorder %s139, %s142
      %p148 = scmp.eq.s32.totalorder %s13, 0
      %p149 = por %p147, %p148
      %p150 = scmp.ne.s32.totalorder %s139, %s142
      %p151 = scmp.eq.s32.totalorder %s18, 1
      %p152 = por %p150, %p151
      %p153 = scmp.ne.s32.totalorder %s142, %s143
      %p154 = scmp.eq.s32.totalorder %s18, 0
      %p155 = por %p153, %p154
      %p156 = scmp.ne.s32.totalorder %s142, %s143
      %p157 = scmp.eq.s32.totalorder %s19, 1
      %p158 = por %p156, %p157
      %p160 = scmp.ne.s32.totalorder %s143, %s159
      %p161 = scmp.eq.s32.totalorder %s19, 0
      %p162 = por %p160, %p161
      %p163 = scmp.le.s32.totalorder 1, %s13
      %p164 = scmp.lt.s32.totalorder %s13, 3
      %p165 = pnand %p163, %p164
      %p166 = pneg %p165
      // Predicated region
      $region9: #{tpu_custom_call.1} parent=5 // pred_check
        _
      $region10: #{tpu_custom_call.1} parent=5 // pred_check_branch
        %168 = sbr.rel (%p165) target = $region12
      $region11: #{tpu_custom_call.1} parent=5 // pred_region
        %s169 = ssub.s32 %s13, 1
        // Predicated region
        $region13: #{tpu_custom_call.1} parent=11 // pred_check
          %p170 = pneg %p77
        $region14: #{tpu_custom_call.1} parent=11 // pred_check_branch
          %172 = sbr.rel (%p170) target = $region16
        $region15: #{tpu_custom_call.1} parent=11 // pred_region
          %p173 = scmp.lt.s32.totalorder %s23, 0
          %s174 = scalar_select %p173, %s23, 0
          %s175 = smul.addr %s174, 8
          %s176 = scalar_lea.vmem %s1, %s175
        $region16: #{tpu_custom_call.1} parent=11 // pred_fallthru
          _
        // Predicated region
        $region17: #{tpu_custom_call.1} parent=11 // pred_check
          %p177 = pneg %p103
        $region18: #{tpu_custom_call.1} parent=11 // pred_check_branch
          %179 = sbr.rel (%p177) target = $region20
        $region19: #{tpu_custom_call.1} parent=11 // pred_region
          %p180 = scmp.lt.s32.totalorder %s23, 0
          %s181 = scalar_select %p180, %s23, 0
          %s182 = smul.addr %s181, 8
          %s183 = scalar_lea.vmem %s2, %s182
        $region20: #{tpu_custom_call.1} parent=11 // pred_fallthru
          _
        // Predicated region
        $region21: #{tpu_custom_call.1} parent=11 // pred_check
          %p184 = pneg %p129
        $region22: #{tpu_custom_call.1} parent=11 // pred_check_branch
          %186 = sbr.rel (%p184) target = $region24
        $region23: #{tpu_custom_call.1} parent=11 // pred_region
          %s187 = smul.u32 8, %s23
          %p188 = scmp.lt.s32.totalorder %s187, 7
          %s189 = scalar_select %p188, %s187, 7
          %s190 = smul.addr %s189, 8
          %s191 = scalar_lea.vmem %s3, %s190
          %s192 = smul.u32 8, %s23
        $region24: #{tpu_custom_call.1} parent=11 // pred_fallthru
          _
      $region12: #{tpu_custom_call.1} parent=5 // pred_fallthru
        _
      %p193 = scmp.lt.s32.totalorder %s13, 2
      // Predicated region
      $region25: #{tpu_custom_call.1} parent=5 // pred_check
        %p194 = pneg %p193
      $region26: #{tpu_custom_call.1} parent=5 // pred_check_branch
        %196 = sbr.rel (%p194) target = $region28
      $region27: #{tpu_custom_call.1} parent=5 // pred_region
        // Predicated region
        $region29: #{tpu_custom_call.1} parent=27 // pred_check
          %p197 = pneg %p45
        $region30: #{tpu_custom_call.1} parent=27 // pred_check_branch
          %199 = sbr.rel (%p197) target = $region32
        $region31: #{tpu_custom_call.1} parent=27 // pred_region
          %p200 = scmp.lt.s32.totalorder %s20, 1
          %s201 = scalar_select %p200, %s20, 1
          %s202 = smul.addr %s201, 8
          %s203 = scalar_lea.vmem %s0, %s202
        $region32: #{tpu_custom_call.1} parent=27 // pred_fallthru
          _
      $region28: #{tpu_custom_call.1} parent=5 // pred_fallthru
        _
      %p204 = scmp.le.s32.totalorder 1, %s13
      %p205 = scmp.lt.s32.totalorder %s13, 3
      %p206 = pnand %p204, %p205
      %p207 = pneg %p206
      // Predicated region
      $region33: #{tpu_custom_call.1} parent=5 // pred_check
        _
      $region34: #{tpu_custom_call.1} parent=5 // pred_check_branch
        %209 = sbr.rel (%p206) target = $region36
      $region35: #{tpu_custom_call.1} parent=5 // pred_region
        %s210 = ssub.s32 %s13, 1
        %p211 = scmp.lt.s32.totalorder %s22, 1
        %s212 = scalar_select %p211, %s22, 1
        %s213 = smul.addr %s212, 8
        %s214 = scalar_lea.vmem %s0, %s213
        %p215 = pneg %p51
        %p216 = pneg %p48
        %p217 = scmp.lt.s32.totalorder %s23, 0
        %s218 = scalar_select %p217, %s23, 0
        %s219 = smul.addr %s218, 8
        %s220 = scalar_lea.vmem %s1, %s219
        %p221 = pneg %p77
        %p222 = pneg %p74
        %p223 = scmp.lt.s32.totalorder %s23, 0
        %s224 = scalar_select %p223, %s23, 0
        %s225 = smul.addr %s224, 8
        %s226 = scalar_lea.vmem %s2, %s225
        %p227 = pneg %p103
        %p228 = pneg %p100
        %s229 = smul.u32 8, %s23
        %p230 = scmp.lt.s32.totalorder %s229, 7
        %s231 = scalar_select %p230, %s229, 7
        %s232 = smul.addr %s231, 8
        %s233 = scalar_lea.vmem %s3, %s232
        %p234 = pneg %p129
        %p235 = pneg %p126
        %p236 = pneg %p155
        %p237 = pneg %p152
        %s238 = sand.u32 %s142, 1
        %s239 = scalar_lea.sflag [#allocation3], %s238
        %s240 = sand.u32 %s142, 1
        %s241 = smul.addr %s240, 8
        %s242 = scalar_lea.vmem [#allocation2], %s241
        %p243 = scmp.lt.s32.totalorder %s22, 1
        %s244 = scalar_select %p243, %s22, 1
        %s245 = smul.addr %s244, 8
        %s246 = scalar_lea.vmem %s0, %s245
        %p247 = scmp.lt.s32.totalorder %s23, 0
        %s248 = scalar_select %p247, %s23, 0
        %s249 = smul.addr %s248, 8
        %s250 = scalar_lea.vmem %s1, %s249
        %p251 = scmp.lt.s32.totalorder %s23, 0
        %s252 = scalar_select %p251, %s23, 0
        %s253 = smul.addr %s252, 8
        %s254 = scalar_lea.vmem %s2, %s253
        %s255 = smul.u32 8, %s23
        %p256 = scmp.lt.s32.totalorder %s255, 7
        %s257 = scalar_select %p256, %s255, 7
        %s258 = smul.addr %s257, 8
        %s259 = scalar_lea.vmem %s3, %s258
        %s260 = smul.u32 8, %s23
        %p261 = scmp.eq.s32.totalorder %s23, 0
        // Predicated region
        $region37: #{tpu_custom_call.1} parent=35 // pred_check
          %p262 = pneg %p261
        $region38: #{tpu_custom_call.1} parent=35 // pred_check_branch
          %264 = sbr.rel (%p262) target = $region40
        $region39: #{tpu_custom_call.1} parent=35 // pred_region
          %vm265 = vcmask 261120
          %266 = vst.msk [vmem:[%s242] sm:$0xff] %vm265, 0.0
        $region40: #{tpu_custom_call.1} parent=35 // pred_fallthru
          _
        %v267 = vld [vmem:[%s246] sm:$0xff]
        %v268 = vld [vmem:[%s250] sm:$0xff]
        %v269 = vld [vmem:[%s250 + $0x8] sm:$0xff]
        %v270 = vld [vmem:[%s250 + $0x10] sm:$0xff]
        %v271 = vld [vmem:[%s250 + $0x18] sm:$0xff]
        %vm272 = vcmask 261120
        %v274 = vsel %vm272, %v267, 0
        %276 = vmatprep.subr.mxu0 0.0
        %277 = vmatpush1.msra.mxu0 %v268
        %278 = vmatprep.subr.mxu0 0.0
        %279 = vmatpush1.msra.mxu0 %v269
        %280 = vmatprep.subr.mxu0 0.0
        %281 = vmatpush1.msra.mxu0 %v270
        %282 = vmatprep.subr.mxu0 0.0
        %283 = vmatpush1.msra.mxu0 %v271
        %284 = vmatprep.subr.mxu0 0.0
        %285 = vmatpush1.msra.mxu0 0.0
        %286 = vmatprep.subr.mxu0 0.0
        %287 = vmatpush1.msra.mxu0 0.0
        %288 = vmatprep.subr.mxu0 0.0
        %289 = vmatpush1.msra.mxu0 0.0
        %290 = vmatprep.subr.mxu0 0.0
        %291 = vmatpush1.msra.mxu0 0.0
        %292 = vmatprep.subr.mxu0 0.0
        %293 = vmatpush1.msra.mxu0 0.0
        %294 = vmatprep.subr.mxu0 0.0
        %295 = vmatpush1.msra.mxu0 0.0
        %296 = vmatprep.subr.mxu0 0.0
        %297 = vmatpush1.msra.mxu0 0.0
        %298 = vmatprep.subr.mxu0 0.0
        %299 = vmatpush1.msra.mxu0 0.0
        %300 = vmatprep.subr.mxu0 0.0
        %301 = vmatpush1.msra.mxu0 0.0
        %302 = vmatprep.subr.mxu0 0.0
        %303 = vmatpush1.msra.mxu0 0.0
        %304 = vmatprep.subr.mxu0 0.0
        %305 = vmatpush1.msra.mxu0 0.0
        %306 = vmatprep.subr.mxu0 0.0
        %307 = vmatpush1.msra.mxu0 0.0
        %308 = vmatprep.subr.mxu0 0.0
        %309 = vmatpush1.msra.mxu0 0.0
        %310 = vmatprep.subr.mxu0 0.0
        %311 = vmatpush1.msra.mxu0 0.0
        %312 = vmatprep.subr.mxu0 0.0
        %313 = vmatpush1.msra.mxu0 0.0
        %314 = vmatprep.subr.mxu0 0.0
        %315 = vmatpush1.msra.mxu0 0.0
        %316 = vmatprep.subr.mxu0 0.0
        %317 = vmatpush1.msra.mxu0 0.0
        %318 = vmatprep.subr.mxu0 0.0
        %319 = vmatpush1.msra.mxu0 0.0
        %320 = vmatprep.subr.mxu0 0.0
        %321 = vmatpush1.msra.mxu0 0.0
        %322 = vmatprep.subr.mxu0 0.0
        %323 = vmatpush1.msra.mxu0 0.0
        %324 = vmatprep.subr.mxu0 0.0
        %325 = vmatpush1.msra.mxu0 0.0
        %326 = vmatprep.subr.mxu0 0.0
        %327 = vmatpush1.msra.mxu0 0.0
        %328 = vmatprep.subr.mxu0 0.0
        %329 = vmatpush1.msra.mxu0 0.0
        %330 = vmatprep.subr.mxu0 0.0
        %331 = vmatpush1.msra.mxu0 0.0
        %332 = vmatprep.subr.mxu0 0.0
        %333 = vmatpush1.msra.mxu0 0.0
        %334 = vmatprep.subr.mxu0 0.0
        %335 = vmatpush1.msra.mxu0 0.0
        %336 = vmatprep.subr.mxu0 0.0
        %337 = vmatpush1.msra.mxu0 0.0
        %338 = vmatprep.subr.mxu0 0.0
        %339 = vmatpush1.msra.mxu0 0.0
        %340 = vmatprep.mubr.f32.mxu0 0.0
        %341 = vmatmul.mubr.f32.gmra.mrb[0].mxu0 %v274
        %v342 = vpop.f32.mrb[0].mxu0
        %v343 = vadd.f32 0.0, %v342
        %v344 = vpop.f32.mrb[0].mxu0
        %345 = vdwg.mxu0
        %v346 = vld [vmem:[%s254] sm:$0xff]
        %v347 = vld [vmem:[%s254 + $0x8] sm:$0xff]
        %v348 = vld [vmem:[%s254 + $0x10] sm:$0xff]
        %v349 = vld [vmem:[%s254 + $0x18] sm:$0xff]
        %350 = vmatprep.subr.mxu0 0.0
        %351 = vmatpush1.msra.mxu0 %v346
        %352 = vmatprep.subr.mxu0 0.0
        %353 = vmatpush1.msra.mxu0 %v347
        %354 = vmatprep.subr.mxu0 0.0
        %355 = vmatpush1.msra.mxu0 %v348
        %356 = vmatprep.subr.mxu0 0.0
        %357 = vmatpush1.msra.mxu0 %v349
        %358 = vmatprep.subr.mxu0 0.0
        %359 = vmatpush1.msra.mxu0 0.0
        %360 = vmatprep.subr.mxu0 0.0
        %361 = vmatpush1.msra.mxu0 0.0
        %362 = vmatprep.subr.mxu0 0.0
        %363 = vmatpush1.msra.mxu0 0.0
        %364 = vmatprep.subr.mxu0 0.0
        %365 = vmatpush1.msra.mxu0 0.0
        %366 = vmatprep.subr.mxu0 0.0
        %367 = vmatpush1.msra.mxu0 0.0
        %368 = vmatprep.subr.mxu0 0.0
        %369 = vmatpush1.msra.mxu0 0.0
        %370 = vmatprep.subr.mxu0 0.0
        %371 = vmatpush1.msra.mxu0 0.0
        %372 = vmatprep.subr.mxu0 0.0
        %373 = vmatpush1.msra.mxu0 0.0
        %374 = vmatprep.subr.mxu0 0.0
        %375 = vmatpush1.msra.mxu0 0.0
        %376 = vmatprep.subr.mxu0 0.0
        %377 = vmatpush1.msra.mxu0 0.0
        %378 = vmatprep.subr.mxu0 0.0
        %379 = vmatpush1.msra.mxu0 0.0
        %380 = vmatprep.subr.mxu0 0.0
        %381 = vmatpush1.msra.mxu0 0.0
        %382 = vmatprep.subr.mxu0 0.0
        %383 = vmatpush1.msra.mxu0 0.0
        %384 = vmatprep.subr.mxu0 0.0
        %385 = vmatpush1.msra.mxu0 0.0
        %386 = vmatprep.subr.mxu0 0.0
        %387 = vmatpush1.msra.mxu0 0.0
        %388 = vmatprep.subr.mxu0 0.0
        %389 = vmatpush1.msra.mxu0 0.0
        %390 = vmatprep.subr.mxu0 0.0
        %391 = vmatpush1.msra.mxu0 0.0
        %392 = vmatprep.subr.mxu0 0.0
        %393 = vmatpush1.msra.mxu0 0.0
        %394 = vmatprep.subr.mxu0 0.0
        %395 = vmatpush1.msra.mxu0 0.0
        %396 = vmatprep.subr.mxu0 0.0
        %397 = vmatpush1.msra.mxu0 0.0
        %398 = vmatprep.subr.mxu0 0.0
        %399 = vmatpush1.msra.mxu0 0.0
        %400 = vmatprep.subr.mxu0 0.0
        %401 = vmatpush1.msra.mxu0 0.0
        %402 = vmatprep.subr.mxu0 0.0
        %403 = vmatpush1.msra.mxu0 0.0
        %404 = vmatprep.subr.mxu0 0.0
        %405 = vmatpush1.msra.mxu0 0.0
        %406 = vmatprep.subr.mxu0 0.0
        %407 = vmatpush1.msra.mxu0 0.0
        %408 = vmatprep.subr.mxu0 0.0
        %409 = vmatpush1.msra.mxu0 0.0
        %410 = vmatprep.subr.mxu0 0.0
        %411 = vmatpush1.msra.mxu0 0.0
        %412 = vmatprep.subr.mxu0 0.0
        %413 = vmatpush1.msra.mxu0 0.0
        %414 = vmatprep.mubr.f32.mxu0 0.0
        %415 = vmatmul.mubr.f32.gmra.mrb[0].mxu0 %v274
        %v416 = vpop.f32.mrb[0].mxu0
        %v417 = vadd.f32 0.0, %v416
        %v418 = vpop.f32.mrb[0].mxu0
        %419 = vdwg.mxu0
        %v420 = vxor.u32 %v343, 2147483648
        %v421 = vmul.f32 %v420, 1.442695
        %v422 = vpow.pop %v421
        %v423 = vadd.f32 %v422, 1.0
        %v424 = vrcp.pop %v423
        %v425 = vmul.f32 1.0, %v424
        %v426 = vmul.f32 %v343, %v425
        %v427 = vmul.f32 %v426, %v417
        %v428 = vld [vmem:[%s242] sm:$0xff]
        %v429 = vld [vmem:[%s259] sm:$0xff]
        %v430 = vld [vmem:[%s259 + $0x8] sm:$0xff]
        %v431 = vld [vmem:[%s259 + $0x10] sm:$0xff]
        %v432 = vld [vmem:[%s259 + $0x18] sm:$0xff]
        %v433 = vld [vmem:[%s259 + $0x20] sm:$0xff]
        %v434 = vld [vmem:[%s259 + $0x28] sm:$0xff]
        %v435 = vld [vmem:[%s259 + $0x30] sm:$0xff]
        %v436 = vld [vmem:[%s259 + $0x38] sm:$0xff]
        %vm437 = vcmask 523264
        %v439 = vsel %vm437, %v427, 0
        %441 = vmatprep.subr.mxu0 0.0
        %442 = vmatpush1.msra.mxu0 %v429
        %443 = vmatprep.subr.mxu0 0.0
        %444 = vmatpush1.msra.mxu0 %v430
        %445 = vmatprep.subr.mxu0 0.0
        %446 = vmatpush1.msra.mxu0 %v431
        %447 = vmatprep.subr.mxu0 0.0
        %448 = vmatpush1.msra.mxu0 %v432
        %449 = vmatprep.subr.mxu0 0.0
        %450 = vmatpush1.msra.mxu0 %v433
        %451 = vmatprep.subr.mxu0 0.0
        %452 = vmatpush1.msra.mxu0 %v434
        %453 = vmatprep.subr.mxu0 0.0
        %454 = vmatpush1.msra.mxu0 %v435
        %455 = vmatprep.subr.mxu0 0.0
        %456 = vmatpush1.msra.mxu0 %v436
        %457 = vmatprep.subr.mxu0 0.0
        %458 = vmatpush1.msra.mxu0 0.0
        %459 = vmatprep.subr.mxu0 0.0
        %460 = vmatpush1.msra.mxu0 0.0
        %461 = vmatprep.subr.mxu0 0.0
        %462 = vmatpush1.msra.mxu0 0.0
        %463 = vmatprep.subr.mxu0 0.0
        %464 = vmatpush1.msra.mxu0 0.0
        %465 = vmatprep.subr.mxu0 0.0
        %466 = vmatpush1.msra.mxu0 0.0
        %467 = vmatprep.subr.mxu0 0.0
        %468 = vmatpush1.msra.mxu0 0.0
        %469 = vmatprep.subr.mxu0 0.0
        %470 = vmatpush1.msra.mxu0 0.0
        %471 = vmatprep.subr.mxu0 0.0
        %472 = vmatpush1.msra.mxu0 0.0
        %473 = vmatprep.subr.mxu0 0.0
        %474 = vmatpush1.msra.mxu0 0.0
        %475 = vmatprep.subr.mxu0 0.0
        %476 = vmatpush1.msra.mxu0 0.0
        %477 = vmatprep.subr.mxu0 0.0
        %478 = vmatpush1.msra.mxu0 0.0
        %479 = vmatprep.subr.mxu0 0.0
        %480 = vmatpush1.msra.mxu0 0.0
        %481 = vmatprep.subr.mxu0 0.0
        %482 = vmatpush1.msra.mxu0 0.0
        %483 = vmatprep.subr.mxu0 0.0
        %484 = vmatpush1.msra.mxu0 0.0
        %485 = vmatprep.subr.mxu0 0.0
        %486 = vmatpush1.msra.mxu0 0.0
        %487 = vmatprep.subr.mxu0 0.0
        %488 = vmatpush1.msra.mxu0 0.0
        %489 = vmatprep.subr.mxu0 0.0
        %490 = vmatpush1.msra.mxu0 0.0
        %491 = vmatprep.subr.mxu0 0.0
        %492 = vmatpush1.msra.mxu0 0.0
        %493 = vmatprep.subr.mxu0 0.0
        %494 = vmatpush1.msra.mxu0 0.0
        %495 = vmatprep.subr.mxu0 0.0
        %496 = vmatpush1.msra.mxu0 0.0
        %497 = vmatprep.subr.mxu0 0.0
        %498 = vmatpush1.msra.mxu0 0.0
        %499 = vmatprep.subr.mxu0 0.0
        %500 = vmatpush1.msra.mxu0 0.0
        %501 = vmatprep.subr.mxu0 0.0
        %502 = vmatpush1.msra.mxu0 0.0
        %503 = vmatprep.subr.mxu0 0.0
        %504 = vmatpush1.msra.mxu0 0.0
        %505 = vmatprep.mubr.f32.mxu0 0.0
        %506 = vmatmul.mubr.f32.gmra.mrb[0].mxu0 %v439
        %v507 = vpop.f32.mrb[0].mxu0
        %v508 = vadd.f32 0.0, %v507
        %v509 = vpop.f32.mrb[0].mxu0
        %510 = vdwg.mxu0
        %v511 = vadd.f32 %v428, %v508
        %512 = vst.msk [vmem:[%s242] sm:$0xff] %vm272, %v511
        %s513 = sand.u32 %s142, 1
        %s514 = scalar_lea.sflag [#allocation3], %s513
        %s515 = sand.u32 %s142, 1
        %s516 = smul.addr %s515, 8
        %s517 = scalar_lea.vmem [#allocation2], %s516
        // Predicated region
        $region41: #{tpu_custom_call.1} parent=35 // pred_check
          %p518 = pneg %p152
        $region42: #{tpu_custom_call.1} parent=35 // pred_check_branch
          %520 = sbr.rel (%p518) target = $region44
        $region43: #{tpu_custom_call.1} parent=35 // pred_region
          %s522 = ssub.s32 128, 128
          %523 = vsyncadd %s514, %s522
          %s524 = smul.addr %s22, 128
          %s525 = scalar_lea.hbm %s4, %s524
          %s527 = sshll.u32 %s517, 4
          %s528 = int_to_ptr.vmem [resolvable:$true] %s527
          %530 = dma.vmem_to_hbm [thread:$0]  %s528, 128, %s525, %s514
        $region44: #{tpu_custom_call.1} parent=35 // pred_fallthru
          _
      $region36: #{tpu_custom_call.1} parent=5 // pred_fallthru
        _
      %p531 = scmp.le.s32.totalorder 2, %s13
      // Predicated region
      $region45: #{tpu_custom_call.1} parent=5 // pred_check
        %p532 = pneg %p531
      $region46: #{tpu_custom_call.1} parent=5 // pred_check_branch
        %534 = sbr.rel (%p532) target = $region48
      $region47: #{tpu_custom_call.1} parent=5 // pred_region
        %s535 = ssub.s32 %s13, 2
        // Predicated region
        $region49: #{tpu_custom_call.1} parent=47 // pred_check
          %p536 = pneg %p158
        $region50: #{tpu_custom_call.1} parent=47 // pred_check_branch
          %538 = sbr.rel (%p536) target = $region52
        $region51: #{tpu_custom_call.1} parent=47 // pred_region
          %s539 = sand.u32 %s143, 1
          %s540 = scalar_lea.sflag [#allocation3], %s539
          %s541 = sand.u32 %s143, 1
          %s542 = smul.addr %s541, 8
          %s543 = scalar_lea.vmem [#allocation2], %s542
          %544 = dma.done %s540, 128
        $region52: #{tpu_custom_call.1} parent=47 // pred_fallthru
          _
      $region48: #{tpu_custom_call.1} parent=5 // pred_fallthru
        _
    $region6: #{tpu_custom_call.1} parent=1 // loop_footer
      %s17 = sadd.s32 1, %s13
    $region7: #{tpu_custom_call.1} parent=1 // loop_footer_branch
      %12 = sbr.rel target = $region3
    $region8: #{tpu_custom_call.1} parent=1 // loop_exit
      _
    %545 = vsyncpa [#allocation3], 1
    %s546 = scalar_lea.sflag [#allocation3], 1
    %547 = vsyncpa %s546, 1

</llo_original>
